<compile_context>
chip_gen: v7x
topology: tpu7x:2x2x1
jax: 0.10.0
libtpu: 0.0.40
codegen_flags: <defaults>
</compile_context>

<pallas_src>
import functools

import jax
import jax.numpy as jnp
from jax import lax
from jax.experimental import pallas as pl
from jax.experimental.pallas import tpu as pltpu


def cam_attention_kernel(x_ref, attn_ref, acc_ref, *, c_blocks):
    """Pass 1: streamed energy accumulation + softmax.

    x_ref   : (1, C, tn)  full-C slab of X for this N-tile (native dtype)
    attn_ref: (1, tc, C)  attention rows (written once, at the last N-tile)
    acc_ref : (tc, C) f32 energy accumulator (VMEM scratch)
    """
    ni = pl.program_id(2)

    @pl.when(ni == 0)
    def _init():
        acc_ref[...] = jnp.zeros_like(acc_ref)

    tc, C = acc_ref.shape
    xf = x_ref[0]                                   # (C, tn)
    if c_blocks == 1:
        xr = xf                                     # rows == full block (typical)
    else:
        start = pl.multiple_of(pl.program_id(1) * tc, 8)
        xr = x_ref[0, pl.ds(start, tc), :]          # slice rows from resident block

    prec = lax.Precision.HIGHEST if xf.dtype == jnp.float32 else None
    acc_ref[...] += lax.dot_general(
        xr, xf,
        dimension_numbers=(((1,), (1,)), ((), ())),  # contract on N for both sides
        preferred_element_type=jnp.float32,
        precision=prec)

    @pl.when(ni == pl.num_programs(2) - 1)
    def _finalize():
        energy = acc_ref[...]                                       # (tc, C) f32
        # softmax(rowmax(E) - E) == softmax(-E); stabilized: exp(rowmin(E) - E).
        e = jnp.exp(jnp.min(energy, axis=-1, keepdims=True) - energy)
        denom = jnp.sum(e, axis=-1, keepdims=True)
        attn_ref[0] = (e / denom).astype(attn_ref.dtype)            # exact divide


def cam_apply_kernel(gamma_ref, attn_ref, x_ref, o_ref):
    """Pass 2: o_tile = gamma * (attn @ x_tile) + x_tile (residual fused)."""
    a = attn_ref[0]                                  # (C, C) in x.dtype (no cast)
    xv = x_ref[0]                                    # (C, tn)
    prec = lax.Precision.HIGHEST if xv.dtype == jnp.float32 else None
    out = jnp.dot(a, xv, preferred_element_type=jnp.float32, precision=prec)
    gamma = gamma_ref[0]                             # f32 scalar from SMEM
    # Reuse the already-loaded xv for the residual (one fewer VMEM load).
    o_ref[0] = (gamma * out + xv.astype(jnp.float32)).astype(o_ref.dtype)


def _round_up(v, m):
    return ((v + m - 1) // m) * m


def _choose_n_tile(N, C, itemsize, tile_n_cap):
    """Pick tn (multiple of 128) and n_tiles; N is padded to tn * n_tiles so we
    never silently degrade to 128-wide tiles for awkward H*W."""
    blk_budget = 16 * 2**20                     # (C, tn) input block, x2 buffers
    cap = min(tile_n_cap,
              max(128, (blk_budget // (2 * C * itemsize)) // 128 * 128))
    n128 = _round_up(N, 128)
    if n128 <= cap:
        return n128, 1
    n_tiles = -(-n128 // cap)                   # cdiv
    tn = _round_up(-(-n128 // n_tiles), 128)    # minimal padding (< 128 per tile)
    return tn, n_tiles


def _choose_c_blocks(B, C):
    """tc = C (single row-block) unless the f32 accumulator would be too large,
    or B == 1 and we want two parallel grid units for the v7x megacore."""
    cb = 1
    while (C % (2 * cb) == 0 and (C // (2 * cb)) % 8 == 0
           and (C // cb) * C * 4 > 8 * 2**20):
        cb *= 2
    if B == 1 and cb == 1 and C % 16 == 0:
        cb = 2
    return cb


def _vmem_limit(est_bytes):
    """Scoped VMEM limit: ~2x the static block estimate, capped at 3/4 of the
    chip's physical VMEM (headroom for Mosaic internal scratch): ~48 MiB on
    v7x, ~96 MiB on v5e/v6e."""
    try:
        cap = int(pltpu.get_tpu_info().vmem_capacity_bytes)
    except Exception:                            # interpret mode / non-TPU host
        cap = 64 * 2**20
    return int(min(3 * cap // 4, max(32 * 2**20, 2 * int(est_bytes))))


def cam_module(x, gamma, *, tile_n_cap=2048):
    """x: (B, C, H, W), gamma: (1,). Returns gamma * (attn @ X) + x in x.dtype."""
    B, C, H, W = x.shape
    N = H * W
    xr = x.reshape(B, C, N)
    gamma = gamma.astype(jnp.float32)
    item = x.dtype.itemsize

    tn, n_tiles = _choose_n_tile(N, C, item, tile_n_cap)
    N_pad = tn * n_tiles
    if N_pad != N:
        # Zero padding is exact: padded columns contribute 0 to the energy and
        # produce 0 output columns that are sliced off below.
        xr = jnp.pad(xr, ((0, 0), (0, 0), (0, N_pad - N)))

    c_blocks = _choose_c_blocks(B, C)
    tc = C // c_blocks

    # ---- Pass 1: attention (B, C, C), emitted in x.dtype ----
    k1_est = 2 * C * tn * item + 2 * tc * C * item + tc * C * 4
    attn = pl.pallas_call(
        functools.partial(cam_attention_kernel, c_blocks=c_blocks),
        out_shape=jax.ShapeDtypeStruct((B, C, C), x.dtype),
        grid=(B, c_blocks, n_tiles),
        in_specs=[pl.BlockSpec((1, C, tn), lambda b, ci, ni: (b, 0, ni))],
        out_specs=pl.BlockSpec((1, tc, C), lambda b, ci, ni: (b, ci, 0)),
        scratch_shapes=[pltpu.VMEM((tc, C), jnp.float32)],
        compiler_params=pltpu.CompilerParams(
            dimension_semantics=("parallel", "parallel", "arbitrary"),
            vmem_limit_bytes=_vmem_limit(k1_est)),
    )(xr)

    # ---- Pass 2: out = gamma * (attn @ X) + X, streamed over N ----
    k2_est = 2 * C * C * item + 4 * C * tn * item + 1024
    out = pl.pallas_call(
        cam_apply_kernel,
        out_shape=jax.ShapeDtypeStruct((B, C, N_pad), x.dtype),
        grid=(B, n_tiles),
        in_specs=[
            pl.BlockSpec(memory_space=pltpu.MemorySpace.SMEM),        # gamma
            pl.BlockSpec((1, C, C), lambda b, ni: (b, 0, 0)),         # attention
            pl.BlockSpec((1, C, tn), lambda b, ni: (b, 0, ni)),       # X tile
        ],
        out_specs=pl.BlockSpec((1, C, tn), lambda b, ni: (b, 0, ni)),
        compiler_params=pltpu.CompilerParams(
            dimension_semantics=("parallel", "parallel"),
            vmem_limit_bytes=_vmem_limit(k2_est)),
    )(gamma, attn, xr)

    if N_pad != N:
        out = out[:, :, :N]
    return out.reshape(B, C, H, W)


def cam_reference(x, gamma):
    """Pure-JAX reference matching the PyTorch forward (f32, exact softmax)."""
    B, C, H, W = x.shape
    q = x.reshape(B, C, -1).astype(jnp.float32)                      # (B, C, N)
    energy = jnp.einsum("bcn,bdn->bcd", q, q, precision="highest")   # (B, C, C)
    energy_new = jnp.max(energy, axis=-1, keepdims=True) - energy
    attn = jax.nn.softmax(energy_new, axis=-1)
    out = jnp.einsum("bcd,bdn->bcn", attn, q,
                     precision="highest").reshape(B, C, H, W)
    return (gamma[0] * out + x.astype(jnp.float32)).astype(x.dtype)


if __name__ == "__main__":
    key = jax.random.PRNGKey(0)
    k1, k2 = jax.random.split(key)

    # Case 1: module init (gamma = zeros(1)) -> output must equal the input.
    B, C, H, W = 2, 4, 16, 16
    x = jax.random.normal(k1, (B, C, H, W), dtype=jnp.float32)
    gamma0 = jnp.zeros((1,), dtype=jnp.float32)
    out0 = jax.block_until_ready(cam_module(x, gamma0))
    assert out0.shape == (B, C, H, W)
    assert jnp.allclose(out0, cam_reference(x, gamma0), atol=1e-5, rtol=1e-5)

    # Case 2: non-zero gamma exercises the full attention path. Exact divide in
    # the softmax (no approx reciprocal); tolerance only covers MXU multi-pass
    # f32 vs XLA 'highest' matmul differences amplified by exp() in the softmax.
    gamma1 = jnp.full((1,), 0.5, dtype=jnp.float32)
    out1 = jax.block_until_ready(cam_module(x, gamma1))
    assert jnp.allclose(out1, cam_reference(x, gamma1), atol=1e-3, rtol=1e-3)

    # Case 3: N not a multiple of 128 (padding path), C % 8 == 0, B == 1.
    x2 = jax.random.normal(k2, (1, 8, 10, 10), dtype=jnp.float32)
    gamma2 = jnp.full((1,), 0.25, dtype=jnp.float32)
    out2 = jax.block_until_ready(cam_module(x2, gamma2))
    assert jnp.allclose(out2, cam_reference(x2, gamma2), atol=1e-3, rtol=1e-3)

    print("KERNEL_OK")
</pallas_src>

<mosaic_0001>
module attributes {stable_mosaic.version = 11 : i64} {
  func.func @cam_attention_kernel(%arg0: i32, %arg1: i32, %arg2: i32, %arg3: memref<1x4x256xf32, #tpu.memory_space<vmem>>, %arg4: memref<1x4x4xf32, #tpu.memory_space<vmem>>, %arg5: memref<4x4xf32, #tpu.memory_space<vmem>>) attributes {dimension_semantics = [#tpu.dimension_semantics<parallel>, #tpu.dimension_semantics<parallel>, #tpu.dimension_semantics<arbitrary>], iteration_bounds = array<i64: 2, 1, 1>, scalar_prefetch = 0 : i64, scratch_operands = 1 : i64, tpu.core_type = #tpu.core_type<tc>, window_params = [{transform_indices = @transform_0, window_bounds = array<i64: 1, 4, 256>}, {transform_indices = @transform_1, window_bounds = array<i64: 1, 4, 4>}]} {
    %c0_i32 = arith.constant 0 : i32
    %0 = arith.cmpi eq, %arg2, %c0_i32 : i32
    %1 = arith.extui %0 : i1 to i32
    %c0_i32_0 = arith.constant 0 : i32
    %2 = arith.cmpi ne, %1, %c0_i32_0 : i32
    scf.if %2 {
      %cst_9 = arith.constant 0.000000e+00 : f32
      %12 = vector.broadcast %cst_9 : f32 to vector<4x4xf32>
      %c0_10 = arith.constant 0 : index
      %c0_11 = arith.constant 0 : index
      %13 = vector.load %arg5[%c0_10, %c0_11] : memref<4x4xf32, #tpu.memory_space<vmem>>, vector<4x4xf32>
      tpu.vector_store %arg5[%c0_10, %c0_11], %12 {strides = array<i32>} : memref<4x4xf32, #tpu.memory_space<vmem>>, vector<4x4xf32>,
    } else {
    }
    %c0 = arith.constant 0 : index
    %c0_1 = arith.constant 0 : index
    %c0_2 = arith.constant 0 : index
    %3 = vector.load %arg3[%c0, %c0_1, %c0_2] : memref<1x4x256xf32, #tpu.memory_space<vmem>>, vector<1x4x256xf32>
    %4 = vector.shape_cast %3 : vector<1x4x256xf32> to vector<4x256xf32>
    %c0_3 = arith.constant 0 : index
    %c0_4 = arith.constant 0 : index
    %5 = vector.load %arg5[%c0_3, %c0_4] : memref<4x4xf32, #tpu.memory_space<vmem>>, vector<4x4xf32>
    %cst = arith.constant dense<0.000000e+00> : vector<4x4xf32>
    %6 = tpu.matmul %4, %4, %cst {dimension_numbers = #tpu.dot_dimension_numbers<[1], [1], [0], [0], [0, 0, 1, 0], [], []>, precision = #tpu.contract_precision<fp32>} : vector<4x256xf32>, vector<4x256xf32>, vector<4x4xf32> -> vector<4x4xf32>
    %7 = arith.addf %5, %6 : vector<4x4xf32>
    %c0_5 = arith.constant 0 : index
    %c0_6 = arith.constant 0 : index
    %8 = vector.load %arg5[%c0_5, %c0_6] : memref<4x4xf32, #tpu.memory_space<vmem>>, vector<4x4xf32>
    tpu.vector_store %arg5[%c0_5, %c0_6], %7 {strides = array<i32>} : memref<4x4xf32, #tpu.memory_space<vmem>>, vector<4x4xf32>,
    %c0_i32_7 = arith.constant 0 : i32
    %9 = arith.cmpi eq, %arg2, %c0_i32_7 : i32
    %10 = arith.extui %9 : i1 to i32
    %c0_i32_8 = arith.constant 0 : i32
    %11 = arith.cmpi ne, %10, %c0_i32_8 : i32
    scf.if %11 {
      %c0_9 = arith.constant 0 : index
      %c0_10 = arith.constant 0 : index
      %12 = vector.load %arg5[%c0_9, %c0_10] : memref<4x4xf32, #tpu.memory_space<vmem>>, vector<4x4xf32>
      %cst_11 = arith.constant dense<0x7F800000> : vector<4xf32>
      %13 = vector.multi_reduction <minimumf>, %12, %cst_11 [1] : vector<4x4xf32> to vector<4xf32>
      %14 = vector.shape_cast %13 : vector<4xf32> to vector<4x1xf32>
      %15 = vector.broadcast %14 : vector<4x1xf32> to vector<4x4xf32>
      %16 = arith.subf %15, %12 : vector<4x4xf32>
      %17 = math.exp %16 : vector<4x4xf32>
      %cst_12 = arith.constant dense<0.000000e+00> : vector<4xf32>
      %18 = vector.multi_reduction <add>, %17, %cst_12 [1] : vector<4x4xf32> to vector<4xf32>
      %19 = vector.shape_cast %18 : vector<4xf32> to vector<4x1xf32>
      %20 = vector.broadcast %19 : vector<4x1xf32> to vector<4x4xf32>
      %21 = arith.divf %17, %20 : vector<4x4xf32>
      %c0_13 = arith.constant 0 : index
      %c0_14 = arith.constant 0 : index
      %c0_15 = arith.constant 0 : index
      %22 = vector.load %arg4[%c0_13, %c0_14, %c0_15] : memref<1x4x4xf32, #tpu.memory_space<vmem>>, vector<1x4x4xf32>
      %23 = vector.shape_cast %22 : vector<1x4x4xf32> to vector<4x4xf32>
      %24 = vector.shape_cast %21 : vector<4x4xf32> to vector<1x4x4xf32>
      tpu.vector_store %arg4[%c0_13, %c0_14, %c0_15], %24 {strides = array<i32>} : memref<1x4x4xf32, #tpu.memory_space<vmem>>, vector<1x4x4xf32>,
    } else {
    }
    return
  }
  func.func @transform_0(%arg0: i32, %arg1: i32, %arg2: i32) -> (i32, i32, i32) {
    %c0_i32 = arith.constant 0 : i32
    %c0_i32_0 = arith.constant 0 : i32
    return %arg0, %c0_i32, %arg2 : i32, i32, i32
  }
  func.func @transform_1(%arg0: i32, %arg1: i32, %arg2: i32) -> (i32, i32, i32) {
    %c0_i32 = arith.constant 0 : i32
    %c0_i32_0 = arith.constant 0 : i32
    return %arg0, %arg1, %c0_i32 : i32, i32, i32
  }
}

</mosaic_0001>

<llo_original>
// kernel: tpu_custom_call.1
$region0: #{tpu_custom_call.1}
  #allocation0 [shape = 'u32[]', space=smem, size = 0x4, offset = 0x4, fixed_abs, tag = 'smem constant byte address 0x4 - core index']
  #allocation1 [shape = 'u32[144,128]{1,0:T(1,128)}', space=vmem, size = 0x12000, scoped, tag = 'internal scratch']
  #allocation2 [shape = 'f32[4,4]{1,0:T(4,128)}', space=vmem, size = 0x800, scoped, tag = 'scratch operand']
  %s0 = inlined_call_operand.hbm [shape: f32[2,4,256], index: 0, kind: input, shape index: {}]
  %s1 = inlined_call_operand.hbm [shape: f32[2,4,4], index: 1, kind: output, shape index: {}]
  %s2 = sld [smem:[#allocation0]]
  $region49: #{tpu_custom_call.1} parent=0
    _
  %s4 = ssub.s32 1, %s2
  %s5 = scalar_select 0, %s4, %s2
  $region1: #{tpu_custom_call.1} parent=0
    #allocation3 [shape = 'u8[8192]{0}', space=vmem, size = 0x2000, scoped, tag = 'input window, operand 0']
    #allocation4 [shape = 's32[2]{0}', space=sflag, size = 0x8, scoped, tag = 'scoped memory for tpu_custom_call.1']
    #allocation5 [shape = 's32[2]{0}', space=sflag, size = 0x8, scoped, tag = 'scoped memory for tpu_custom_call.1']
    #allocation6 [shape = 'u8[4096]{0}', space=vmem, size = 0x1000, scoped, tag = 'output window, operand 0']
    %6 = vsyncpa [#allocation4], 0
    %s7 = scalar_lea.sflag [#allocation4], 1
    %8 = vsyncpa %s7, 0
    %9 = vsyncpa [#allocation5], 0
    %s10 = scalar_lea.sflag [#allocation5], 1
    %11 = vsyncpa %s10, 0
    loop: start=0, step=1, limit=4
    $region2: #{tpu_custom_call.1} parent=1 // loop_pre_header
      _
    $region3: #{tpu_custom_call.1} parent=1 // loop_header
      %s13 = sphi 0, %s17
      %p14 = scmp.ge.s32.totalorder %s13, 4
      %s20 = sphi 0, %s39
      %s21 = sphi 0, %s35
      %s22 = sphi 0, %s31
      %s23 = sphi 0, %s20
      %s24 = sphi 0, %s21
      %s25 = sphi 0, %s22
      %s26 = sphi 0, %s23
      %s27 = sphi 0, %s24
      %s28 = sphi 0, %s25
      %s44 = sphi 0, %s46
      %s47 = sphi 0, %s44
      %s48 = sphi 0, %s47
      %s64 = sphi 0, %s48
      %s72 = sphi 0, %s74
      %s75 = sphi 0, %s72
      %s76 = sphi 0, %s75
      %s92 = sphi 0, %s76
    $region4: #{tpu_custom_call.1} parent=1 // loop_header_branch
      %16 = sbr.rel (%p14) target = $region8
    $region5: #{tpu_custom_call.1} parent=1 // loop_body
      %s18 = ssub.s32 %s13, 1
      %s19 = ssub.s32 %s13, 2
      %s29 = sadd.s32 1, %s22
      %p30 = scmp.ge.s32.totalorder %s29, 1
      %s31 = scalar_select %p30, 0, %s29
      %s32 = sadd.s32 1, %s21
      %s33 = scalar_select %p30, %s32, %s21
      %p34 = scmp.ge.s32.totalorder %s33, 1
      %s35 = scalar_select %p34, 0, %s33
      %s36 = sadd.s32 1, %s20
      %s37 = scalar_select %p34, %s36, %s20
      %p38 = scmp.ge.s32.totalorder %s37, 2
      %s39 = scalar_select %p38, 0, %s37
      %s40 = ssub.s32 %s20, %s39
      %s41 = ssub.s32 %s22, %s31
      %s42 = sor.u32 %s40, %s41
      %p43 = scmp.eq.s32.totalorder %s42, 0
      %s45 = sadd.s32 %s44, 1
      %s46 = scalar_select %p43, %s44, %s45
      %p49 = pneg %p43
      %p50 = scmp.eq.s32.totalorder %s13, 1
      %p51 = por %p49, %p50
      %p52 = scmp.ne.s32.totalorder %s44, %s47
      %p53 = scmp.eq.s32.totalorder %s13, 0
      %p54 = por %p52, %p53
      %p55 = scmp.ne.s32.totalorder %s44, %s47
      %p56 = scmp.eq.s32.totalorder %s18, 1
      %p57 = por %p55, %p56
      %p58 = scmp.ne.s32.totalorder %s47, %s48
      %p59 = scmp.eq.s32.totalorder %s18, 0
      %p60 = por %p58, %p59
      %p61 = scmp.ne.s32.totalorder %s47, %s48
      %p62 = scmp.eq.s32.totalorder %s19, 1
      %p63 = por %p61, %p62
      %p65 = scmp.ne.s32.totalorder %s48, %s64
      %p66 = scmp.eq.s32.totalorder %s19, 0
      %p67 = por %p65, %p66
      %s68 = ssub.s32 %s20, %s39
      %s69 = ssub.s32 %s21, %s35
      %s70 = sor.u32 %s68, %s69
      %p71 = scmp.eq.s32.totalorder %s70, 0
      %s73 = sadd.s32 %s72, 1
      %s74 = scalar_select %p71, %s72, %s73
      %p77 = pneg %p71
      %p78 = scmp.eq.s32.totalorder %s13, 1
      %p79 = por %p77, %p78
      %p80 = scmp.ne.s32.totalorder %s72, %s75
      %p81 = scmp.eq.s32.totalorder %s13, 0
      %p82 = por %p80, %p81
      %p83 = scmp.ne.s32.totalorder %s72, %s75
      %p84 = scmp.eq.s32.totalorder %s18, 1
      %p85 = por %p83, %p84
      %p86 = scmp.ne.s32.totalorder %s75, %s76
      %p87 = scmp.eq.s32.totalorder %s18, 0
      %p88 = por %p86, %p87
      %p89 = scmp.ne.s32.totalorder %s75, %s76
      %p90 = scmp.eq.s32.totalorder %s19, 1
      %p91 = por %p89, %p90
      %p93 = scmp.ne.s32.totalorder %s76, %s92
      %p94 = scmp.eq.s32.totalorder %s19, 0
      %p95 = por %p93, %p94
      %p96 = scmp.le.s32.totalorder 1, %s13
      %p97 = scmp.lt.s32.totalorder %s13, 3
      %p98 = pnand %p96, %p97
      %p99 = pneg %p98
      // Predicated region
      $region9: #{tpu_custom_call.1} parent=5 // pred_check
        _
      $region10: #{tpu_custom_call.1} parent=5 // pred_check_branch
        %101 = sbr.rel (%p98) target = $region12
      $region11: #{tpu_custom_call.1} parent=5 // pred_region
        %s102 = ssub.s32 %s13, 1
      $region12: #{tpu_custom_call.1} parent=5 // pred_fallthru
        _
      %p103 = scmp.lt.s32.totalorder %s13, 2
      // Predicated region
      $region13: #{tpu_custom_call.1} parent=5 // pred_check
        %p104 = pneg %p103
      $region14: #{tpu_custom_call.1} parent=5 // pred_check_branch
        %106 = sbr.rel (%p104) target = $region16
      $region15: #{tpu_custom_call.1} parent=5 // pred_region
        // Predicated region
        $region17: #{tpu_custom_call.1} parent=15 // pred_check
          %p107 = pneg %p54
        $region18: #{tpu_custom_call.1} parent=15 // pred_check_branch
          %109 = sbr.rel (%p107) target = $region20
        $region19: #{tpu_custom_call.1} parent=15 // pred_region
          %s110 = sand.u32 %s44, 1
          %s111 = scalar_lea.sflag [#allocation4], %s110
          %s112 = sand.u32 %s44, 1
          %s113 = smul.addr %s112, 8
          %s114 = scalar_lea.vmem [#allocation3], %s113
          %s115 = smul.u32 2, %s22
          %s117 = ssub.s32 128, 128
          %118 = vsyncadd %s111, %s117
          %s119 = smul.addr %s20, 2
          %s120 = sadd.s32 %s115, %s119
          %s121 = smul.addr %s120, 64
          %s122 = scalar_lea.hbm %s0, %s121
          %s124 = sshll.u32 %s114, 4
          %s125 = int_to_ptr.vmem [resolvable:$true] %s124
          %127 = dma.hbm_to_vmem [thread:$0]  %s122, 128, %s125, %s111
        $region20: #{tpu_custom_call.1} parent=15 // pred_fallthru
          _
      $region16: #{tpu_custom_call.1} parent=5 // pred_fallthru
        _
      %p128 = scmp.le.s32.totalorder 1, %s13
      %p129 = scmp.lt.s32.totalorder %s13, 3
      %p130 = pnand %p128, %p129
      %p131 = pneg %p130
      // Predicated region
      $region21: #{tpu_custom_call.1} parent=5 // pred_check
        _
      $region22: #{tpu_custom_call.1} parent=5 // pred_check_branch
        %133 = sbr.rel (%p130) target = $region24
      $region23: #{tpu_custom_call.1} parent=5 // pred_region
        %s134 = ssub.s32 %s13, 1
        %s135 = sand.u32 %s47, 1
        %s136 = scalar_lea.sflag [#allocation4], %s135
        %s137 = sand.u32 %s47, 1
        %s138 = smul.addr %s137, 8
        %s139 = scalar_lea.vmem [#allocation3], %s138
        // Predicated region
        $region25: #{tpu_custom_call.1} parent=23 // pred_check
          %p140 = pneg %p60
        $region26: #{tpu_custom_call.1} parent=23 // pred_check_branch
          %142 = sbr.rel (%p140) target = $region28
        $region27: #{tpu_custom_call.1} parent=23 // pred_region
          %143 = dma.done %s136, 128
        $region28: #{tpu_custom_call.1} parent=23 // pred_fallthru
          _
        %s144 = sand.u32 %s47, 1
        %s145 = scalar_lea.sflag [#allocation4], %s144
        %s146 = sand.u32 %s47, 1
        %s147 = smul.addr %s146, 8
        %s148 = scalar_lea.vmem [#allocation3], %s147
        %p149 = pneg %p60
        %p150 = pneg %p57
        %p151 = pneg %p88
        %p152 = pneg %p85
        %s153 = sand.u32 %s75, 1
        %s154 = scalar_lea.sflag [#allocation5], %s153
        %s155 = sand.u32 %s75, 1
        %s156 = smul.addr %s155, 4
        %s157 = scalar_lea.vmem [#allocation6], %s156
        %s158 = smul.u32 2, %s25
        %p159 = scmp.eq.s32.totalorder %s25, 0
        // Predicated region
        $region29: #{tpu_custom_call.1} parent=23 // pred_check
          %p160 = pneg %p159
        $region30: #{tpu_custom_call.1} parent=23 // pred_check_branch
          %162 = sbr.rel (%p160) target = $region32
        $region31: #{tpu_custom_call.1} parent=23 // pred_region
          %vm163 = vcmask 27648
          %164 = vst.msk [vmem:[#allocation2] sm:$0xf] %vm163, 0.0
        $region32: #{tpu_custom_call.1} parent=23 // pred_fallthru
          _
        %v165 = vld [vmem:[%s139] sm:$0xff]
        %v166 = vld [vmem:[#allocation2] sm:$0xf]
        %v168 = vcombine.high %v165, %v165
        %v170 = vand.u32 %v168, 4294901760
        %171 = vmatprep.subr.mxu0 %v170
        %v172 = vand.u32 %v165, 4294901760
        %173 = vmatpush1.xpose.msra.mxu0 %v172
        %174 = vmatprep.subr.mxu0 0.0
        %175 = vmatpush1.xpose.msra.mxu0 0.0
        %176 = vmatprep.subr.mxu0 0.0
        %177 = vmatpush1.xpose.msra.mxu0 0.0
        %178 = vmatprep.subr.mxu0 0.0
        %179 = vmatpush1.xpose.msra.mxu0 0.0
        %180 = vmatprep.subr.mxu0 0.0
        %181 = vmatpush1.xpose.msra.mxu0 0.0
        %182 = vmatprep.subr.mxu0 0.0
        %183 = vmatpush1.xpose.msra.mxu0 0.0
        %184 = vmatprep.subr.mxu0 0.0
        %185 = vmatpush1.xpose.msra.mxu0 0.0
        %186 = vmatprep.subr.mxu0 0.0
        %187 = vmatpush1.xpose.msra.mxu0 0.0
        %188 = vmatprep.subr.mxu0 0.0
        %189 = vmatpush1.xpose.msra.mxu0 0.0
        %190 = vmatprep.subr.mxu0 0.0
        %191 = vmatpush1.xpose.msra.mxu0 0.0
        %192 = vmatprep.subr.mxu0 0.0
        %193 = vmatpush1.xpose.msra.mxu0 0.0
        %194 = vmatprep.subr.mxu0 0.0
        %195 = vmatpush1.xpose.msra.mxu0 0.0
        %196 = vmatprep.subr.mxu0 0.0
        %197 = vmatpush1.xpose.msra.mxu0 0.0
        %198 = vmatprep.subr.mxu0 0.0
        %199 = vmatpush1.xpose.msra.mxu0 0.0
        %200 = vmatprep.subr.mxu0 0.0
        %201 = vmatpush1.xpose.msra.mxu0 0.0
        %202 = vmatprep.subr.mxu0 0.0
        %203 = vmatpush1.xpose.msra.mxu0 0.0
        %204 = vmatprep.subr.mxu0 0.0
        %205 = vmatpush1.xpose.msra.mxu0 0.0
        %206 = vmatprep.subr.mxu0 0.0
        %207 = vmatpush1.xpose.msra.mxu0 0.0
        %208 = vmatprep.subr.mxu0 0.0
        %209 = vmatpush1.xpose.msra.mxu0 0.0
        %210 = vmatprep.subr.mxu0 0.0
        %211 = vmatpush1.xpose.msra.mxu0 0.0
        %212 = vmatprep.subr.mxu0 0.0
        %213 = vmatpush1.xpose.msra.mxu0 0.0
        %214 = vmatprep.subr.mxu0 0.0
        %215 = vmatpush1.xpose.msra.mxu0 0.0
        %216 = vmatprep.subr.mxu0 0.0
        %217 = vmatpush1.xpose.msra.mxu0 0.0
        %218 = vmatprep.subr.mxu0 0.0
        %219 = vmatpush1.xpose.msra.mxu0 0.0
        %220 = vmatprep.subr.mxu0 0.0
        %221 = vmatpush1.xpose.msra.mxu0 0.0
        %222 = vmatprep.subr.mxu0 0.0
        %223 = vmatpush1.xpose.msra.mxu0 0.0
        %224 = vmatprep.subr.mxu0 0.0
        %225 = vmatpush1.xpose.msra.mxu0 0.0
        %226 = vmatprep.subr.mxu0 0.0
        %227 = vmatpush1.xpose.msra.mxu0 0.0
        %228 = vmatprep.subr.mxu0 0.0
        %229 = vmatpush1.xpose.msra.mxu0 0.0
        %230 = vmatprep.subr.mxu0 0.0
        %231 = vmatpush1.xpose.msra.mxu0 0.0
        %232 = vmatprep.subr.mxu0 0.0
        %233 = vmatpush1.xpose.msra.mxu0 0.0
        %234 = vmatprep.subr.mxu0 0.0
        %235 = vmatpush1.xpose.msra.mxu0 0.0
        %v236 = vand.u32 %v168, 4294901760
        %v237 = vsub.f32 %v168, %v236
        %v238 = vand.u32 %v237, 4294901760
        %v239 = vsub.f32 %v237, %v238
        %v240 = vand.u32 %v239, 4294901760
        %241 = vmatprep.mubr.f32.mxu0 %v240
        %v242 = vand.u32 %v165, 4294901760
        %v243 = vsub.f32 %v165, %v242
        %v244 = vand.u32 %v243, 4294901760
        %v245 = vsub.f32 %v243, %v244
        %v246 = vand.u32 %v245, 4294901760
        %247 = vmatmul.mubr.f32.gmra.mrb[0].mxu0 %v246
        %v248 = vpop.f32.mrb[0].mxu0
        %v249 = vadd.f32 0.0, %v248
        %v250 = vpop.f32.mrb[0].mxu0
        %251 = vdwg.mxu0
        %v252 = vand.u32 %v168, 4294901760
        %v253 = vsub.f32 %v168, %v252
        %v254 = vand.u32 %v253, 4294901760
        %v255 = vsub.f32 %v253, %v254
        %v256 = vand.u32 %v255, 4294901760
        %257 = vmatprep.subr.mxu0 %v256
        %v258 = vand.u32 %v165, 4294901760
        %v259 = vsub.f32 %v165, %v258
        %v260 = vand.u32 %v259, 4294901760
        %v261 = vsub.f32 %v259, %v260
        %v262 = vand.u32 %v261, 4294901760
        %263 = vmatpush1.xpose.msra.mxu0 %v262
        %264 = vmatprep.subr.mxu0 0.0
        %265 = vmatpush1.xpose.msra.mxu0 0.0
        %266 = vmatprep.subr.mxu0 0.0
        %267 = vmatpush1.xpose.msra.mxu0 0.0
        %268 = vmatprep.subr.mxu0 0.0
        %269 = vmatpush1.xpose.msra.mxu0 0.0
        %270 = vmatprep.subr.mxu0 0.0
        %271 = vmatpush1.xpose.msra.mxu0 0.0
        %272 = vmatprep.subr.mxu0 0.0
        %273 = vmatpush1.xpose.msra.mxu0 0.0
        %274 = vmatprep.subr.mxu0 0.0
        %275 = vmatpush1.xpose.msra.mxu0 0.0
        %276 = vmatprep.subr.mxu0 0.0
        %277 = vmatpush1.xpose.msra.mxu0 0.0
        %278 = vmatprep.subr.mxu0 0.0
        %279 = vmatpush1.xpose.msra.mxu0 0.0
        %280 = vmatprep.subr.mxu0 0.0
        %281 = vmatpush1.xpose.msra.mxu0 0.0
        %282 = vmatprep.subr.mxu0 0.0
        %283 = vmatpush1.xpose.msra.mxu0 0.0
        %284 = vmatprep.subr.mxu0 0.0
        %285 = vmatpush1.xpose.msra.mxu0 0.0
        %286 = vmatprep.subr.mxu0 0.0
        %287 = vmatpush1.xpose.msra.mxu0 0.0
        %288 = vmatprep.subr.mxu0 0.0
        %289 = vmatpush1.xpose.msra.mxu0 0.0
        %290 = vmatprep.subr.mxu0 0.0
        %291 = vmatpush1.xpose.msra.mxu0 0.0
        %292 = vmatprep.subr.mxu0 0.0
        %293 = vmatpush1.xpose.msra.mxu0 0.0
        %294 = vmatprep.subr.mxu0 0.0
        %295 = vmatpush1.xpose.msra.mxu0 0.0
        %296 = vmatprep.subr.mxu0 0.0
        %297 = vmatpush1.xpose.msra.mxu0 0.0
        %298 = vmatprep.subr.mxu0 0.0
        %299 = vmatpush1.xpose.msra.mxu0 0.0
        %300 = vmatprep.subr.mxu0 0.0
        %301 = vmatpush1.xpose.msra.mxu0 0.0
        %302 = vmatprep.subr.mxu0 0.0
        %303 = vmatpush1.xpose.msra.mxu0 0.0
        %304 = vmatprep.subr.mxu0 0.0
        %305 = vmatpush1.xpose.msra.mxu0 0.0
        %306 = vmatprep.subr.mxu0 0.0
        %307 = vmatpush1.xpose.msra.mxu0 0.0
        %308 = vmatprep.subr.mxu0 0.0
        %309 = vmatpush1.xpose.msra.mxu0 0.0
        %310 = vmatprep.subr.mxu0 0.0
        %311 = vmatpush1.xpose.msra.mxu0 0.0
        %312 = vmatprep.subr.mxu0 0.0
        %313 = vmatpush1.xpose.msra.mxu0 0.0
        %314 = vmatprep.subr.mxu0 0.0
        %315 = vmatpush1.xpose.msra.mxu0 0.0
        %316 = vmatprep.subr.mxu0 0.0
        %317 = vmatpush1.xpose.msra.mxu0 0.0
        %318 = vmatprep.subr.mxu0 0.0
        %319 = vmatpush1.xpose.msra.mxu0 0.0
        %320 = vmatprep.subr.mxu0 0.0
        %321 = vmatpush1.xpose.msra.mxu0 0.0
        %322 = vmatprep.subr.mxu0 0.0
        %323 = vmatpush1.xpose.msra.mxu0 0.0
        %324 = vmatprep.subr.mxu0 0.0
        %325 = vmatpush1.xpose.msra.mxu0 0.0
        %v326 = vand.u32 %v168, 4294901760
        %327 = vmatprep.mubr.f32.mxu0 %v326
        %v328 = vand.u32 %v165, 4294901760
        %329 = vmatmul.mubr.f32.gmra.mrb[0].mxu0 %v328
        %v330 = vpop.f32.mrb[0].mxu0
        %v331 = vadd.f32 %v249, %v330
        %v332 = vpop.f32.mrb[0].mxu0
        %333 = vdwg.mxu0
        %v334 = vand.u32 %v168, 4294901760
        %v335 = vsub.f32 %v168, %v334
        %336 = vmatprep.subr.mxu0 %v335
        %v337 = vand.u32 %v165, 4294901760
        %v338 = vsub.f32 %v165, %v337
        %339 = vmatpush1.xpose.msra.mxu0 %v338
        %340 = vmatprep.subr.mxu0 0.0
        %341 = vmatpush1.xpose.msra.mxu0 0.0
        %342 = vmatprep.subr.mxu0 0.0
        %343 = vmatpush1.xpose.msra.mxu0 0.0
        %344 = vmatprep.subr.mxu0 0.0
        %345 = vmatpush1.xpose.msra.mxu0 0.0
        %346 = vmatprep.subr.mxu0 0.0
        %347 = vmatpush1.xpose.msra.mxu0 0.0
        %348 = vmatprep.subr.mxu0 0.0
        %349 = vmatpush1.xpose.msra.mxu0 0.0
        %350 = vmatprep.subr.mxu0 0.0
        %351 = vmatpush1.xpose.msra.mxu0 0.0
        %352 = vmatprep.subr.mxu0 0.0
        %353 = vmatpush1.xpose.msra.mxu0 0.0
        %354 = vmatprep.subr.mxu0 0.0
        %355 = vmatpush1.xpose.msra.mxu0 0.0
        %356 = vmatprep.subr.mxu0 0.0
        %357 = vmatpush1.xpose.msra.mxu0 0.0
        %358 = vmatprep.subr.mxu0 0.0
        %359 = vmatpush1.xpose.msra.mxu0 0.0
        %360 = vmatprep.subr.mxu0 0.0
        %361 = vmatpush1.xpose.msra.mxu0 0.0
        %362 = vmatprep.subr.mxu0 0.0
        %363 = vmatpush1.xpose.msra.mxu0 0.0
        %364 = vmatprep.subr.mxu0 0.0
        %365 = vmatpush1.xpose.msra.mxu0 0.0
        %366 = vmatprep.subr.mxu0 0.0
        %367 = vmatpush1.xpose.msra.mxu0 0.0
        %368 = vmatprep.subr.mxu0 0.0
        %369 = vmatpush1.xpose.msra.mxu0 0.0
        %370 = vmatprep.subr.mxu0 0.0
        %371 = vmatpush1.xpose.msra.mxu0 0.0
        %372 = vmatprep.subr.mxu0 0.0
        %373 = vmatpush1.xpose.msra.mxu0 0.0
        %374 = vmatprep.subr.mxu0 0.0
        %375 = vmatpush1.xpose.msra.mxu0 0.0
        %376 = vmatprep.subr.mxu0 0.0
        %377 = vmatpush1.xpose.msra.mxu0 0.0
        %378 = vmatprep.subr.mxu0 0.0
        %379 = vmatpush1.xpose.msra.mxu0 0.0
        %380 = vmatprep.subr.mxu0 0.0
        %381 = vmatpush1.xpose.msra.mxu0 0.0
        %382 = vmatprep.subr.mxu0 0.0
        %383 = vmatpush1.xpose.msra.mxu0 0.0
        %384 = vmatprep.subr.mxu0 0.0
        %385 = vmatpush1.xpose.msra.mxu0 0.0
        %386 = vmatprep.subr.mxu0 0.0
        %387 = vmatpush1.xpose.msra.mxu0 0.0
        %388 = vmatprep.subr.mxu0 0.0
        %389 = vmatpush1.xpose.msra.mxu0 0.0
        %390 = vmatprep.subr.mxu0 0.0
        %391 = vmatpush1.xpose.msra.mxu0 0.0
        %392 = vmatprep.subr.mxu0 0.0
        %393 = vmatpush1.xpose.msra.mxu0 0.0
        %394 = vmatprep.subr.mxu0 0.0
        %395 = vmatpush1.xpose.msra.mxu0 0.0
        %396 = vmatprep.subr.mxu0 0.0
        %397 = vmatpush1.xpose.msra.mxu0 0.0
        %398 = vmatprep.subr.mxu0 0.0
        %399 = vmatpush1.xpose.msra.mxu0 0.0
        %400 = vmatprep.subr.mxu0 0.0
        %401 = vmatpush1.xpose.msra.mxu0 0.0
        %v402 = vand.u32 %v168, 4294901760
        %v403 = vsub.f32 %v168, %v402
        %404 = vmatprep.mubr.f32.mxu0 %v403
        %v405 = vand.u32 %v165, 4294901760
        %v406 = vsub.f32 %v165, %v405
        %407 = vmatmul.mubr.f32.gmra.mrb[0].mxu0 %v406
        %v408 = vpop.f32.mrb[0].mxu0
        %v409 = vadd.f32 %v331, %v408
        %v410 = vpop.f32.mrb[0].mxu0
        %411 = vdwg.mxu0
        %v412 = vand.u32 %v168, 4294901760
        %413 = vmatprep.subr.mxu0 %v412
        %v414 = vand.u32 %v165, 4294901760
        %415 = vmatpush1.xpose.msra.mxu0 %v414
        %416 = vmatprep.subr.mxu0 0.0
        %417 = vmatpush1.xpose.msra.mxu0 0.0
        %418 = vmatprep.subr.mxu0 0.0
        %419 = vmatpush1.xpose.msra.mxu0 0.0
        %420 = vmatprep.subr.mxu0 0.0
        %421 = vmatpush1.xpose.msra.mxu0 0.0
        %422 = vmatprep.subr.mxu0 0.0
        %423 = vmatpush1.xpose.msra.mxu0 0.0
        %424 = vmatprep.subr.mxu0 0.0
        %425 = vmatpush1.xpose.msra.mxu0 0.0
        %426 = vmatprep.subr.mxu0 0.0
        %427 = vmatpush1.xpose.msra.mxu0 0.0
        %428 = vmatprep.subr.mxu0 0.0
        %429 = vmatpush1.xpose.msra.mxu0 0.0
        %430 = vmatprep.subr.mxu0 0.0
        %431 = vmatpush1.xpose.msra.mxu0 0.0
        %432 = vmatprep.subr.mxu0 0.0
        %433 = vmatpush1.xpose.msra.mxu0 0.0
        %434 = vmatprep.subr.mxu0 0.0
        %435 = vmatpush1.xpose.msra.mxu0 0.0
        %436 = vmatprep.subr.mxu0 0.0
        %437 = vmatpush1.xpose.msra.mxu0 0.0
        %438 = vmatprep.subr.mxu0 0.0
        %439 = vmatpush1.xpose.msra.mxu0 0.0
        %440 = vmatprep.subr.mxu0 0.0
        %441 = vmatpush1.xpose.msra.mxu0 0.0
        %442 = vmatprep.subr.mxu0 0.0
        %443 = vmatpush1.xpose.msra.mxu0 0.0
        %444 = vmatprep.subr.mxu0 0.0
        %445 = vmatpush1.xpose.msra.mxu0 0.0
        %446 = vmatprep.subr.mxu0 0.0
        %447 = vmatpush1.xpose.msra.mxu0 0.0
        %448 = vmatprep.subr.mxu0 0.0
        %449 = vmatpush1.xpose.msra.mxu0 0.0
        %450 = vmatprep.subr.mxu0 0.0
        %451 = vmatpush1.xpose.msra.mxu0 0.0
        %452 = vmatprep.subr.mxu0 0.0
        %453 = vmatpush1.xpose.msra.mxu0 0.0
        %454 = vmatprep.subr.mxu0 0.0
        %455 = vmatpush1.xpose.msra.mxu0 0.0
        %456 = vmatprep.subr.mxu0 0.0
        %457 = vmatpush1.xpose.msra.mxu0 0.0
        %458 = vmatprep.subr.mxu0 0.0
        %459 = vmatpush1.xpose.msra.mxu0 0.0
        %460 = vmatprep.subr.mxu0 0.0
        %461 = vmatpush1.xpose.msra.mxu0 0.0
        %462 = vmatprep.subr.mxu0 0.0
        %463 = vmatpush1.xpose.msra.mxu0 0.0
        %464 = vmatprep.subr.mxu0 0.0
        %465 = vmatpush1.xpose.msra.mxu0 0.0
        %466 = vmatprep.subr.mxu0 0.0
        %467 = vmatpush1.xpose.msra.mxu0 0.0
        %468 = vmatprep.subr.mxu0 0.0
        %469 = vmatpush1.xpose.msra.mxu0 0.0
        %470 = vmatprep.subr.mxu0 0.0
        %471 = vmatpush1.xpose.msra.mxu0 0.0
        %472 = vmatprep.subr.mxu0 0.0
        %473 = vmatpush1.xpose.msra.mxu0 0.0
        %474 = vmatprep.subr.mxu0 0.0
        %475 = vmatpush1.xpose.msra.mxu0 0.0
        %476 = vmatprep.subr.mxu0 0.0
        %477 = vmatpush1.xpose.msra.mxu0 0.0
        %v478 = vand.u32 %v168, 4294901760
        %v479 = vsub.f32 %v168, %v478
        %v480 = vand.u32 %v479, 4294901760
        %481 = vmatprep.mubr.f32.mxu0 %v480
        %v482 = vand.u32 %v165, 4294901760
        %v483 = vsub.f32 %v165, %v482
        %v484 = vand.u32 %v483, 4294901760
        %485 = vmatmul.mubr.f32.gmra.mrb[0].mxu0 %v484
        %v486 = vpop.f32.mrb[0].mxu0
        %v487 = vadd.f32 %v409, %v486
        %v488 = vpop.f32.mrb[0].mxu0
        %489 = vdwg.mxu0
        %v490 = vand.u32 %v168, 4294901760
        %v491 = vsub.f32 %v168, %v490
        %v492 = vand.u32 %v491, 4294901760
        %493 = vmatprep.subr.mxu0 %v492
        %v494 = vand.u32 %v165, 4294901760
        %v495 = vsub.f32 %v165, %v494
        %v496 = vand.u32 %v495, 4294901760
        %497 = vmatpush1.xpose.msra.mxu0 %v496
        %498 = vmatprep.subr.mxu0 0.0
        %499 = vmatpush1.xpose.msra.mxu0 0.0
        %500 = vmatprep.subr.mxu0 0.0
        %501 = vmatpush1.xpose.msra.mxu0 0.0
        %502 = vmatprep.subr.mxu0 0.0
        %503 = vmatpush1.xpose.msra.mxu0 0.0
        %504 = vmatprep.subr.mxu0 0.0
        %505 = vmatpush1.xpose.msra.mxu0 0.0
        %506 = vmatprep.subr.mxu0 0.0
        %507 = vmatpush1.xpose.msra.mxu0 0.0
        %508 = vmatprep.subr.mxu0 0.0
        %509 = vmatpush1.xpose.msra.mxu0 0.0
        %510 = vmatprep.subr.mxu0 0.0
        %511 = vmatpush1.xpose.msra.mxu0 0.0
        %512 = vmatprep.subr.mxu0 0.0
        %513 = vmatpush1.xpose.msra.mxu0 0.0
        %514 = vmatprep.subr.mxu0 0.0
        %515 = vmatpush1.xpose.msra.mxu0 0.0
        %516 = vmatprep.subr.mxu0 0.0
        %517 = vmatpush1.xpose.msra.mxu0 0.0
        %518 = vmatprep.subr.mxu0 0.0
        %519 = vmatpush1.xpose.msra.mxu0 0.0
        %520 = vmatprep.subr.mxu0 0.0
        %521 = vmatpush1.xpose.msra.mxu0 0.0
        %522 = vmatprep.subr.mxu0 0.0
        %523 = vmatpush1.xpose.msra.mxu0 0.0
        %524 = vmatprep.subr.mxu0 0.0
        %525 = vmatpush1.xpose.msra.mxu0 0.0
        %526 = vmatprep.subr.mxu0 0.0
        %527 = vmatpush1.xpose.msra.mxu0 0.0
        %528 = vmatprep.subr.mxu0 0.0
        %529 = vmatpush1.xpose.msra.mxu0 0.0
        %530 = vmatprep.subr.mxu0 0.0
        %531 = vmatpush1.xpose.msra.mxu0 0.0
        %532 = vmatprep.subr.mxu0 0.0
        %533 = vmatpush1.xpose.msra.mxu0 0.0
        %534 = vmatprep.subr.mxu0 0.0
        %535 = vmatpush1.xpose.msra.mxu0 0.0
        %536 = vmatprep.subr.mxu0 0.0
        %537 = vmatpush1.xpose.msra.mxu0 0.0
        %538 = vmatprep.subr.mxu0 0.0
        %539 = vmatpush1.xpose.msra.mxu0 0.0
        %540 = vmatprep.subr.mxu0 0.0
        %541 = vmatpush1.xpose.msra.mxu0 0.0
        %542 = vmatprep.subr.mxu0 0.0
        %543 = vmatpush1.xpose.msra.mxu0 0.0
        %544 = vmatprep.subr.mxu0 0.0
        %545 = vmatpush1.xpose.msra.mxu0 0.0
        %546 = vmatprep.subr.mxu0 0.0
        %547 = vmatpush1.xpose.msra.mxu0 0.0
        %548 = vmatprep.subr.mxu0 0.0
        %549 = vmatpush1.xpose.msra.mxu0 0.0
        %550 = vmatprep.subr.mxu0 0.0
        %551 = vmatpush1.xpose.msra.mxu0 0.0
        %552 = vmatprep.subr.mxu0 0.0
        %553 = vmatpush1.xpose.msra.mxu0 0.0
        %554 = vmatprep.subr.mxu0 0.0
        %555 = vmatpush1.xpose.msra.mxu0 0.0
        %556 = vmatprep.subr.mxu0 0.0
        %557 = vmatpush1.xpose.msra.mxu0 0.0
        %558 = vmatprep.subr.mxu0 0.0
        %559 = vmatpush1.xpose.msra.mxu0 0.0
        %v560 = vand.u32 %v168, 4294901760
        %561 = vmatprep.mubr.f32.mxu0 %v560
        %v562 = vand.u32 %v165, 4294901760
        %563 = vmatmul.mubr.f32.gmra.mrb[0].mxu0 %v562
        %v564 = vpop.f32.mrb[0].mxu0
        %v565 = vadd.f32 %v487, %v564
        %v566 = vpop.f32.mrb[0].mxu0
        %567 = vdwg.mxu0
        %v568 = vand.u32 %v168, 4294901760
        %569 = vmatprep.subr.mxu0 %v568
        %v570 = vand.u32 %v165, 4294901760
        %571 = vmatpush1.xpose.msra.mxu0 %v570
        %572 = vmatprep.subr.mxu0 0.0
        %573 = vmatpush1.xpose.msra.mxu0 0.0
        %574 = vmatprep.subr.mxu0 0.0
        %575 = vmatpush1.xpose.msra.mxu0 0.0
        %576 = vmatprep.subr.mxu0 0.0
        %577 = vmatpush1.xpose.msra.mxu0 0.0
        %578 = vmatprep.subr.mxu0 0.0
        %579 = vmatpush1.xpose.msra.mxu0 0.0
        %580 = vmatprep.subr.mxu0 0.0
        %581 = vmatpush1.xpose.msra.mxu0 0.0
        %582 = vmatprep.subr.mxu0 0.0
        %583 = vmatpush1.xpose.msra.mxu0 0.0
        %584 = vmatprep.subr.mxu0 0.0
        %585 = vmatpush1.xpose.msra.mxu0 0.0
        %586 = vmatprep.subr.mxu0 0.0
        %587 = vmatpush1.xpose.msra.mxu0 0.0
        %588 = vmatprep.subr.mxu0 0.0
        %589 = vmatpush1.xpose.msra.mxu0 0.0
        %590 = vmatprep.subr.mxu0 0.0
        %591 = vmatpush1.xpose.msra.mxu0 0.0
        %592 = vmatprep.subr.mxu0 0.0
        %593 = vmatpush1.xpose.msra.mxu0 0.0
        %594 = vmatprep.subr.mxu0 0.0
        %595 = vmatpush1.xpose.msra.mxu0 0.0
        %596 = vmatprep.subr.mxu0 0.0
        %597 = vmatpush1.xpose.msra.mxu0 0.0
        %598 = vmatprep.subr.mxu0 0.0
        %599 = vmatpush1.xpose.msra.mxu0 0.0
        %600 = vmatprep.subr.mxu0 0.0
        %601 = vmatpush1.xpose.msra.mxu0 0.0
        %602 = vmatprep.subr.mxu0 0.0
        %603 = vmatpush1.xpose.msra.mxu0 0.0
        %604 = vmatprep.subr.mxu0 0.0
        %605 = vmatpush1.xpose.msra.mxu0 0.0
        %606 = vmatprep.subr.mxu0 0.0
        %607 = vmatpush1.xpose.msra.mxu0 0.0
        %608 = vmatprep.subr.mxu0 0.0
        %609 = vmatpush1.xpose.msra.mxu0 0.0
        %610 = vmatprep.subr.mxu0 0.0
        %611 = vmatpush1.xpose.msra.mxu0 0.0
        %612 = vmatprep.subr.mxu0 0.0
        %613 = vmatpush1.xpose.msra.mxu0 0.0
        %614 = vmatprep.subr.mxu0 0.0
        %615 = vmatpush1.xpose.msra.mxu0 0.0
        %616 = vmatprep.subr.mxu0 0.0
        %617 = vmatpush1.xpose.msra.mxu0 0.0
        %618 = vmatprep.subr.mxu0 0.0
        %619 = vmatpush1.xpose.msra.mxu0 0.0
        %620 = vmatprep.subr.mxu0 0.0
        %621 = vmatpush1.xpose.msra.mxu0 0.0
        %622 = vmatprep.subr.mxu0 0.0
        %623 = vmatpush1.xpose.msra.mxu0 0.0
        %624 = vmatprep.subr.mxu0 0.0
        %625 = vmatpush1.xpose.msra.mxu0 0.0
        %626 = vmatprep.subr.mxu0 0.0
        %627 = vmatpush1.xpose.msra.mxu0 0.0
        %628 = vmatprep.subr.mxu0 0.0
        %629 = vmatpush1.xpose.msra.mxu0 0.0
        %630 = vmatprep.subr.mxu0 0.0
        %631 = vmatpush1.xpose.msra.mxu0 0.0
        %632 = vmatprep.subr.mxu0 0.0
        %633 = vmatpush1.xpose.msra.mxu0 0.0
        %v634 = vand.u32 %v168, 4294901760
        %635 = vmatprep.mubr.f32.mxu0 %v634
        %v636 = vand.u32 %v165, 4294901760
        %637 = vmatmul.mubr.f32.gmra.mrb[0].mxu0 %v636
        %v638 = vpop.f32.mrb[0].mxu0
        %v639 = vadd.f32 %v565, %v638
        %v640 = vpop.f32.mrb[0].mxu0
        %641 = vdwg.mxu0
        %v642 = vadd.f32 %v166, %v639
        %vm643 = vcmask 27648
        %644 = vst.msk [vmem:[#allocation2] sm:$0xf] %vm643, %v642
        // Predicated region
        $region33: #{tpu_custom_call.1} parent=23 // pred_check
          %p645 = pneg %p159
        $region34: #{tpu_custom_call.1} parent=23 // pred_check_branch
          %647 = sbr.rel (%p645) target = $region36
        $region35: #{tpu_custom_call.1} parent=23 // pred_region
          %v648 = vld [vmem:[#allocation2] sm:$0xf]
          %v649 = vsel %vm643, %v648, inf
          %650 = vmin.xlane.f32.xlu0 %v649
          %v651 = vpop.xlane.xlu0 %650
          %v652 = vsub.f32 %v651, %v648
          %v653 = vmul.f32 %v652, 1.442695
          %v654 = vpow.pop %v653
          %v655 = vsel %vm643, %v654, 0.0
          %656 = vadd.xlane.f32.xlu0 %v655
          %v657 = vpop.xlane.xlu0 %656
          %v658 = vrcp.pop %v657
          %v659 = vmul.f32 %v654, %v658
          %660 = vst.msk [vmem:[%s157] sm:$0xf] %vm643, %v659
        $region36: #{tpu_custom_call.1} parent=23 // pred_fallthru
          _
        %s661 = sand.u32 %s75, 1
        %s662 = scalar_lea.sflag [#allocation5], %s661
        %s663 = sand.u32 %s75, 1
        %s664 = smul.addr %s663, 4
        %s665 = scalar_lea.vmem [#allocation6], %s664
        // Predicated region
        $region37: #{tpu_custom_call.1} parent=23 // pred_check
          %p666 = pneg %p85
        $region38: #{tpu_custom_call.1} parent=23 // pred_check_branch
          %668 = sbr.rel (%p666) target = $region40
        $region39: #{tpu_custom_call.1} parent=23 // pred_region
          %s670 = ssub.s32 64, 64
          %671 = vsyncadd %s662, %s670
          %s672 = sadd.s32 %s24, %s23
          %s673 = smul.addr %s672, 64
          %s674 = scalar_lea.hbm %s1, %s673
          %s676 = sshll.u32 %s665, 4
          %s677 = int_to_ptr.vmem [resolvable:$true] %s676
          %679 = dma.vmem_to_hbm [thread:$0]  %s677, 64, %s674, %s662
        $region40: #{tpu_custom_call.1} parent=23 // pred_fallthru
          _
      $region24: #{tpu_custom_call.1} parent=5 // pred_fallthru
        _
      %p680 = scmp.le.s32.totalorder 2, %s13
      // Predicated region
      $region41: #{tpu_custom_call.1} parent=5 // pred_check
        %p681 = pneg %p680
      $region42: #{tpu_custom_call.1} parent=5 // pred_check_branch
        %683 = sbr.rel (%p681) target = $region44
      $region43: #{tpu_custom_call.1} parent=5 // pred_region
        %s684 = ssub.s32 %s13, 2
        // Predicated region
        $region45: #{tpu_custom_call.1} parent=43 // pred_check
          %p685 = pneg %p91
        $region46: #{tpu_custom_call.1} parent=43 // pred_check_branch
          %687 = sbr.rel (%p685) target = $region48
        $region47: #{tpu_custom_call.1} parent=43 // pred_region
          %s688 = sand.u32 %s76, 1
          %s689 = scalar_lea.sflag [#allocation5], %s688
          %s690 = sand.u32 %s76, 1
          %s691 = smul.addr %s690, 4
          %s692 = scalar_lea.vmem [#allocation6], %s691
          %693 = dma.done %s689, 64
        $region48: #{tpu_custom_call.1} parent=43 // pred_fallthru
          _
      $region44: #{tpu_custom_call.1} parent=5 // pred_fallthru
        _
    $region6: #{tpu_custom_call.1} parent=1 // loop_footer
      %s17 = sadd.s32 1, %s13
    $region7: #{tpu_custom_call.1} parent=1 // loop_footer_branch
      %12 = sbr.rel target = $region3
    $region8: #{tpu_custom_call.1} parent=1 // loop_exit
      _
    %694 = vsyncpa [#allocation4], 1
    %s695 = scalar_lea.sflag [#allocation4], 1
    %696 = vsyncpa %s695, 1
    %697 = vsyncpa [#allocation5], 1
    %s698 = scalar_lea.sflag [#allocation5], 1
    %699 = vsyncpa %s698, 1

</llo_original>
